<compile_context>
chip_gen: v7x
topology: tpu7x:2x2x1
jax: 0.10.0
libtpu: 0.0.40
codegen_flags: <defaults>
</compile_context>

<pallas_src>
import jax
import jax.numpy as jnp
import numpy as np
from jax.experimental import pallas as pl
from jax.experimental.pallas import tpu as pltpu

# ----------------------------- configuration ---------------------------------
SR = 16000
N_FFT = 128
WIN_LENGTH = N_FFT
HOP_LENGTH = N_FFT // 2           # 64: each frame = 2 consecutive hop-sized chunks
N_MELS = 16
F_MIN = 0.0
F_MAX = SR / 2.0
NORM_STATS = (-4.5, 5.0)          # deterministic (mean, std)
MEAN, STD = NORM_STATS
EPS = float(jnp.finfo(jnp.float32).eps)   # torch.finfo().eps (float32)
N_FREQ = N_FFT // 2 + 1           # 65


# --------------------------- parameter construction --------------------------
def hann_window(n: int) -> np.ndarray:
    # torch.hann_window(n, periodic=True)
    k = np.arange(n, dtype=np.float64)
    return 0.5 - 0.5 * np.cos(2.0 * np.pi * k / n)


def windowed_dft_matrix() -> np.ndarray:
    """Hann-windowed one-sided DFT as a single fused matrix (n_fft, 2*n_freq).

    Columns [0, n_freq)        -> win[n] *  cos(2*pi*n*k/n_fft)   (real part)
    Columns [n_freq, 2*n_freq) -> win[n] * -sin(2*pi*n*k/n_fft)   (imag part)
    """
    win = hann_window(WIN_LENGTH)
    n = np.arange(N_FFT, dtype=np.float64)[:, None]
    k = np.arange(N_FREQ, dtype=np.float64)[None, :]
    ang = 2.0 * np.pi * n * k / N_FFT
    w = np.concatenate([np.cos(ang), -np.sin(ang)], axis=1) * win[:, None]
    return w.astype(np.float32)                           # (n_fft, 2*n_freq)


def mel_filterbank(n_freqs: int, f_min: float, f_max: float, n_mels: int,
                   sample_rate: int) -> np.ndarray:
    # torchaudio.functional.melscale_fbanks(norm=None, mel_scale="htk") -> (n_freqs, n_mels)
    def hz_to_mel(f):
        return 2595.0 * np.log10(1.0 + f / 700.0)

    def mel_to_hz(m):
        return 700.0 * (10.0 ** (m / 2595.0) - 1.0)

    all_freqs = np.linspace(0.0, sample_rate // 2, n_freqs)
    m_pts = np.linspace(hz_to_mel(f_min), hz_to_mel(f_max), n_mels + 2)
    f_pts = mel_to_hz(m_pts)
    f_diff = f_pts[1:] - f_pts[:-1]                       # (n_mels + 1,)
    slopes = f_pts[None, :] - all_freqs[:, None]          # (n_freqs, n_mels + 2)
    down_slopes = (-1.0 * slopes[:, :-2]) / f_diff[:-1]
    up_slopes = slopes[:, 2:] / f_diff[1:]
    fb = np.maximum(0.0, np.minimum(down_slopes, up_slopes))
    return fb.astype(np.float32)                          # (n_freqs, n_mels)


def mel_fb_transposed_doubled() -> np.ndarray:
    """(n_mels, 2*n_freq): [fb; fb]^T so that mel = (ri*ri) @ [fb; fb] can be
    computed as einsum('mk,fk->mf'), producing the output already transposed."""
    fb = mel_filterbank(N_FREQ, F_MIN, F_MAX, N_MELS, SR)     # (n_freq, n_mels)
    fb2 = np.concatenate([fb, fb], axis=0)                    # (2*n_freq, n_mels)
    return np.ascontiguousarray(fb2.T).astype(np.float32)     # (n_mels, 2*n_freq)


# ------------------------------- Pallas kernel --------------------------------
def _lms_kernel(chunks_ref, w_ref, fbt_ref, out_ref):
    # chunks_ref: (1, n_frames + 1, HOP)   hop-sized chunks of padded waveform
    # w_ref:      (N_FFT, 2 * N_FREQ)      window-folded [cos | -sin] DFT matrix
    # fbt_ref:    (N_MELS, 2 * N_FREQ)     duplicated mel filterbank, transposed
    # out_ref:    (1, N_MELS, n_frames)    frames on the lane axis
    chunks = chunks_ref[0]                                 # (F + 1, HOP)
    lo = chunks[:-1]                                       # first half of each frame
    hi = chunks[1:]                                        # second half of each frame

    w = w_ref[...]                                         # (N_FFT, 2*N_FREQ)
    # Windowed one-sided DFT (real | imag); frame built implicitly from 2 chunks.
    ri = (jnp.dot(lo, w[:HOP_LENGTH], preferred_element_type=jnp.float32)
          + jnp.dot(hi, w[HOP_LENGTH:], preferred_element_type=jnp.float32))
    sq = ri * ri                                           # [re^2 | im^2], (F, 130)

    # power -> mel, fused with the output transpose: (n_mels, F) = fbt @ sq^T
    mel_t = jnp.einsum("mk,fk->mf", fbt_ref[...], sq,
                       preferred_element_type=jnp.float32)  # (N_MELS, F)

    out_ref[0] = ((jnp.log(mel_t + EPS) - MEAN) / STD).astype(out_ref.dtype)


def _padded_chunks(x: jax.Array):
    """Reflect 'center' padding + contiguous hop-chunk view (no gather)."""
    pad = N_FFT // 2
    xp = jnp.pad(x, ((0, 0), (pad, pad)), mode="reflect")            # (B, T + n_fft)
    n_frames = 1 + (xp.shape[1] - N_FFT) // HOP_LENGTH
    n_chunks = n_frames + 1                                          # chunks per row
    chunks = xp[:, : n_chunks * HOP_LENGTH].reshape(x.shape[0], n_chunks, HOP_LENGTH)
    return chunks, n_frames


def to_lms(x: jax.Array) -> jax.Array:
    """x: (B, T) float32 waveform -> (B, 1, n_mels, n_frames) float32."""
    B, _ = x.shape
    chunks, n_frames = _padded_chunks(x)
    n_chunks = n_frames + 1

    # --- parameters (deterministic, derived from config) ---
    w = jnp.asarray(windowed_dft_matrix())                           # (n_fft, 2*n_freq)
    fbt = jnp.asarray(mel_fb_transposed_doubled())                   # (n_mels, 2*n_freq)

    # Advisory cost estimate: two (F,64)@(64,130) matmuls + one (16,130)@(130,F).
    flops_per_frame = (4 * HOP_LENGTH * 2 * N_FREQ          # DFT matmuls
                       + 2 * 2 * N_FREQ * N_MELS            # mel matmul
                       + 2 * 2 * N_FREQ                     # square
                       + 3 * N_MELS)                        # +eps, -mean, /std
    cost = pl.CostEstimate(
        flops=int(B * n_frames * flops_per_frame),
        transcendentals=int(B * n_frames * N_MELS),
        bytes_accessed=int(4 * (chunks.size + w.size + fbt.size
                                + B * N_MELS * n_frames)))

    out = pl.pallas_call(
        _lms_kernel,
        out_shape=jax.ShapeDtypeStruct((B, N_MELS, n_frames), jnp.float32),
        grid=(B,),
        in_specs=[
            pl.BlockSpec((1, n_chunks, HOP_LENGTH), lambda b: (b, 0, 0)),
            pl.BlockSpec((N_FFT, 2 * N_FREQ), lambda b: (0, 0)),
            pl.BlockSpec((N_MELS, 2 * N_FREQ), lambda b: (0, 0)),
        ],
        out_specs=pl.BlockSpec((1, N_MELS, n_frames), lambda b: (b, 0, 0)),
        compiler_params=pltpu.CompilerParams(dimension_semantics=("parallel",)),
        cost_estimate=cost,
    )(chunks, w, fbt)                                                # (B, n_mels, F)

    # --- torch output layout (B, 1, n_mels, n_frames) — free newaxis only ---
    return out[:, None, :, :]


# ------------------------- pure-JAX reference (check) --------------------------
def to_lms_ref(x: jax.Array) -> jax.Array:
    chunks, n_frames = _padded_chunks(x)
    lo, hi = chunks[:, :-1], chunks[:, 1:]
    w = jnp.asarray(windowed_dft_matrix())
    fbt = jnp.asarray(mel_fb_transposed_doubled())
    hp = jax.lax.Precision.HIGHEST
    ri = (jnp.einsum("bfn,nk->bfk", lo, w[:HOP_LENGTH], precision=hp)
          + jnp.einsum("bfn,nk->bfk", hi, w[HOP_LENGTH:], precision=hp))
    mel = jnp.einsum("bfk,mk->bmf", ri * ri, fbt, precision=hp)      # (B, n_mels, F)
    return ((jnp.log(mel + EPS) - MEAN) / STD)[:, None, :, :]


# ----------------------------------- main -------------------------------------
if __name__ == "__main__":
    key = jax.random.PRNGKey(0)
    B, T = 2, 1024
    x = jax.random.normal(key, (B, T), dtype=jnp.float32)

    y = to_lms(x)
    jax.block_until_ready(y)

    expected_frames = 1 + T // HOP_LENGTH
    assert y.shape == (B, 1, N_MELS, expected_frames), y.shape
    assert y.dtype == jnp.float32
    assert bool(jnp.all(jnp.isfinite(y)))

    y_ref = to_lms_ref(x)
    np.testing.assert_allclose(np.asarray(y), np.asarray(y_ref),
                               rtol=1e-3, atol=2e-3)

    print("KERNEL_OK")
</pallas_src>

<mosaic_0001>
module attributes {stable_mosaic.version = 11 : i64} {
  func.func @_lms_kernel(%arg0: i32, %arg1: memref<1x18x64xf32, #tpu.memory_space<vmem>>, %arg2: memref<128x130xf32, #tpu.memory_space<vmem>>, %arg3: memref<16x130xf32, #tpu.memory_space<vmem>>, %arg4: memref<1x16x17xf32, #tpu.memory_space<vmem>>) attributes {dimension_semantics = [#tpu.dimension_semantics<parallel>], iteration_bounds = array<i64: 2>, scalar_prefetch = 0 : i64, scratch_operands = 0 : i64, tpu.core_type = #tpu.core_type<tc>, window_params = [{transform_indices = @transform_0, window_bounds = array<i64: 1, 18, 64>}, {pipeline_mode = #tpu.pipeline_mode<synchronous>, transform_indices = @transform_1, window_bounds = array<i64: 128, 130>}, {pipeline_mode = #tpu.pipeline_mode<synchronous>, transform_indices = @transform_2, window_bounds = array<i64: 16, 130>}, {transform_indices = @transform_3, window_bounds = array<i64: 1, 16, 17>}]} {
    %c0 = arith.constant 0 : index
    %c0_0 = arith.constant 0 : index
    %c0_1 = arith.constant 0 : index
    %0 = vector.load %arg1[%c0, %c0_0, %c0_1] : memref<1x18x64xf32, #tpu.memory_space<vmem>>, vector<1x18x64xf32>
    %1 = vector.shape_cast %0 : vector<1x18x64xf32> to vector<18x64xf32>
    %2 = vector.extract_strided_slice %1 {offsets = [0, 0], sizes = [17, 64], strides = [1, 1]} : vector<18x64xf32> to vector<17x64xf32>
    %3 = vector.extract_strided_slice %1 {offsets = [1, 0], sizes = [17, 64], strides = [1, 1]} : vector<18x64xf32> to vector<17x64xf32>
    %c0_2 = arith.constant 0 : index
    %c0_3 = arith.constant 0 : index
    %4 = vector.load %arg2[%c0_2, %c0_3] : memref<128x130xf32, #tpu.memory_space<vmem>>, vector<128x130xf32>
    %5 = vector.extract_strided_slice %4 {offsets = [0, 0], sizes = [64, 130], strides = [1, 1]} : vector<128x130xf32> to vector<64x130xf32>
    %cst = arith.constant dense<0.000000e+00> : vector<17x130xf32>
    %6 = tpu.matmul %2, %5, %cst {dimension_numbers = #tpu.dot_dimension_numbers<[1], [0], [0], [1], [0, 0, 1, 1], [], []>} : vector<17x64xf32>, vector<64x130xf32>, vector<17x130xf32> -> vector<17x130xf32>
    %7 = vector.extract_strided_slice %4 {offsets = [64, 0], sizes = [64, 130], strides = [1, 1]} : vector<128x130xf32> to vector<64x130xf32>
    %cst_4 = arith.constant dense<0.000000e+00> : vector<17x130xf32>
    %8 = tpu.matmul %3, %7, %cst_4 {dimension_numbers = #tpu.dot_dimension_numbers<[1], [0], [0], [1], [0, 0, 1, 1], [], []>} : vector<17x64xf32>, vector<64x130xf32>, vector<17x130xf32> -> vector<17x130xf32>
    %9 = arith.addf %6, %8 : vector<17x130xf32>
    %10 = arith.mulf %9, %9 : vector<17x130xf32>
    %c0_5 = arith.constant 0 : index
    %c0_6 = arith.constant 0 : index
    %11 = vector.load %arg3[%c0_5, %c0_6] : memref<16x130xf32, #tpu.memory_space<vmem>>, vector<16x130xf32>
    "tpu.trace_start"() <{level = 10 : i32, message = "mk,fk->mf"}> : () -> ()
    %cst_7 = arith.constant dense<0.000000e+00> : vector<16x17xf32>
    %12 = tpu.matmul %11, %10, %cst_7 {dimension_numbers = #tpu.dot_dimension_numbers<[1], [1], [0], [0], [0, 0, 1, 0], [], []>} : vector<16x130xf32>, vector<17x130xf32>, vector<16x17xf32> -> vector<16x17xf32>
    "tpu.trace_stop"() : () -> ()
    %cst_8 = arith.constant 1.1920929E-7 : f32
    %13 = vector.broadcast %cst_8 : f32 to vector<16x17xf32>
    %14 = arith.addf %12, %13 : vector<16x17xf32>
    %15 = math.log %14 : vector<16x17xf32>
    %cst_9 = arith.constant -4.500000e+00 : f32
    %16 = vector.broadcast %cst_9 : f32 to vector<16x17xf32>
    %17 = arith.subf %15, %16 : vector<16x17xf32>
    %cst_10 = arith.constant 5.000000e+00 : f32
    %18 = vector.broadcast %cst_10 : f32 to vector<16x17xf32>
    %19 = arith.divf %17, %18 : vector<16x17xf32>
    %c0_11 = arith.constant 0 : index
    %c0_12 = arith.constant 0 : index
    %c0_13 = arith.constant 0 : index
    %20 = vector.load %arg4[%c0_11, %c0_12, %c0_13] : memref<1x16x17xf32, #tpu.memory_space<vmem>>, vector<1x16x17xf32>
    %21 = vector.shape_cast %20 : vector<1x16x17xf32> to vector<16x17xf32>
    %22 = vector.shape_cast %19 : vector<16x17xf32> to vector<1x16x17xf32>
    tpu.vector_store %arg4[%c0_11, %c0_12, %c0_13], %22 {strides = array<i32>} : memref<1x16x17xf32, #tpu.memory_space<vmem>>, vector<1x16x17xf32>,
    return
  }
  func.func @transform_0(%arg0: i32) -> (i32, i32, i32) {
    %c0_i32 = arith.constant 0 : i32
    %c0_i32_0 = arith.constant 0 : i32
    %c0_i32_1 = arith.constant 0 : i32
    return %arg0, %c0_i32, %c0_i32_0 : i32, i32, i32
  }
  func.func @transform_1(%arg0: i32) -> (i32, i32) {
    %c0_i32 = arith.constant 0 : i32
    %c0_i32_0 = arith.constant 0 : i32
    %c0_i32_1 = arith.constant 0 : i32
    return %c0_i32, %c0_i32_0 : i32, i32
  }
  func.func @transform_2(%arg0: i32) -> (i32, i32) {
    %c0_i32 = arith.constant 0 : i32
    %c0_i32_0 = arith.constant 0 : i32
    %c0_i32_1 = arith.constant 0 : i32
    return %c0_i32, %c0_i32_0 : i32, i32
  }
  func.func @transform_3(%arg0: i32) -> (i32, i32, i32) {
    %c0_i32 = arith.constant 0 : i32
    %c0_i32_0 = arith.constant 0 : i32
    %c0_i32_1 = arith.constant 0 : i32
    return %arg0, %c0_i32, %c0_i32_0 : i32, i32, i32
  }
}

</mosaic_0001>

<llo_original>
// kernel: tpu_custom_call.1
$region0: #{tpu_custom_call.1}
  #allocation0 [shape = 'u32[]', space=smem, size = 0x4, offset = 0x4, fixed_abs, tag = 'smem constant byte address 0x4 - core index']
  #allocation1 [shape = 'u32[144,128]{1,0:T(1,128)}', space=vmem, size = 0x12000, scoped, tag = 'internal scratch']
  %s0 = inlined_call_operand.vmem [shape: f32[2,18,64], index: 0, kind: input, shape index: {}]
  %s1 = inlined_call_operand.vmem [shape: f32[128,130], index: 1, kind: input, shape index: {}]
  %s2 = inlined_call_operand.vmem [shape: f32[16,130], index: 2, kind: input, shape index: {}]
  %s3 = inlined_call_operand.hbm [shape: f32[2,16,17], index: 3, kind: output, shape index: {}]
  %s4 = sld [smem:[#allocation0]]
  $region45: #{tpu_custom_call.1} parent=0
    _
  %s6 = ssub.s32 1, %s4
  %s7 = scalar_select 0, %s6, %s4
  $region1: #{tpu_custom_call.1} parent=0
    #allocation2 [shape = 'u8[16384]{0}', space=vmem, size = 0x4000, scoped, tag = 'output window, operand 0']
    #allocation3 [shape = 's32[2]{0}', space=sflag, size = 0x8, scoped, tag = 'scoped memory for tpu_custom_call.1']
    %8 = vsyncpa [#allocation3], 0
    %s9 = scalar_lea.sflag [#allocation3], 1
    %10 = vsyncpa %s9, 0
    loop: start=0, step=1, limit=4
    $region2: #{tpu_custom_call.1} parent=1 // loop_pre_header
      _
    $region3: #{tpu_custom_call.1} parent=1 // loop_header
      %s12 = sphi 0, %s16
      %p13 = scmp.ge.s32.totalorder %s12, 4
      %s22 = sphi 0, %s24
      %s25 = sphi 0, %s22
      %s26 = sphi 0, %s25
      %s42 = sphi 0, %s26
      %s46 = sphi 0, %s46
      %s48 = sphi 0, %s46
      %s49 = sphi 0, %s48
      %s63 = sphi 0, %s49
      %s67 = sphi 0, %s67
      %s69 = sphi 0, %s67
      %s70 = sphi 0, %s69
      %s84 = sphi 0, %s70
      %s90 = sphi 0, %s92
      %s93 = sphi 0, %s90
      %s94 = sphi 0, %s93
      %s110 = sphi 0, %s94
    $region4: #{tpu_custom_call.1} parent=1 // loop_header_branch
      %15 = sbr.rel (%p13) target = $region8
    $region5: #{tpu_custom_call.1} parent=1 // loop_body
      %s17 = ssub.s32 %s12, 1
      %s18 = ssub.s32 %s12, 2
      %s19 = sadd.s32 %s12, 1
      %s20 = ssub.s32 %s12, %s19
      %p21 = scmp.eq.s32.totalorder %s20, 0
      %s23 = sadd.s32 %s22, 1
      %s24 = scalar_select %p21, %s22, %s23
      %p27 = pneg %p21
      %p28 = scmp.eq.s32.totalorder %s12, 1
      %p29 = por %p27, %p28
      %p30 = scmp.ne.s32.totalorder %s22, %s25
      %p31 = scmp.eq.s32.totalorder %s12, 0
      %p32 = por %p30, %p31
      %p33 = scmp.ne.s32.totalorder %s22, %s25
      %p34 = scmp.eq.s32.totalorder %s17, 1
      %p35 = por %p33, %p34
      %p36 = scmp.ne.s32.totalorder %s25, %s26
      %p37 = scmp.eq.s32.totalorder %s17, 0
      %p38 = por %p36, %p37
      %p39 = scmp.ne.s32.totalorder %s25, %s26
      %p40 = scmp.eq.s32.totalorder %s18, 1
      %p41 = por %p39, %p40
      %p43 = scmp.ne.s32.totalorder %s26, %s42
      %p44 = scmp.eq.s32.totalorder %s18, 0
      %p45 = por %p43, %p44
      %s47 = sadd.s32 %s46, 1
      %p50 = scmp.eq.s32.totalorder %s12, 1
      %p51 = scmp.ne.s32.totalorder %s46, %s48
      %p52 = scmp.eq.s32.totalorder %s12, 0
      %p53 = por %p51, %p52
      %p54 = scmp.ne.s32.totalorder %s46, %s48
      %p55 = scmp.eq.s32.totalorder %s17, 1
      %p56 = por %p54, %p55
      %p57 = scmp.ne.s32.totalorder %s48, %s49
      %p58 = scmp.eq.s32.totalorder %s17, 0
      %p59 = por %p57, %p58
      %p60 = scmp.ne.s32.totalorder %s48, %s49
      %p61 = scmp.eq.s32.totalorder %s18, 1
      %p62 = por %p60, %p61
      %p64 = scmp.ne.s32.totalorder %s49, %s63
      %p65 = scmp.eq.s32.totalorder %s18, 0
      %p66 = por %p64, %p65
      %s68 = sadd.s32 %s67, 1
      %p71 = scmp.eq.s32.totalorder %s12, 1
      %p72 = scmp.ne.s32.totalorder %s67, %s69
      %p73 = scmp.eq.s32.totalorder %s12, 0
      %p74 = por %p72, %p73
      %p75 = scmp.ne.s32.totalorder %s67, %s69
      %p76 = scmp.eq.s32.totalorder %s17, 1
      %p77 = por %p75, %p76
      %p78 = scmp.ne.s32.totalorder %s69, %s70
      %p79 = scmp.eq.s32.totalorder %s17, 0
      %p80 = por %p78, %p79
      %p81 = scmp.ne.s32.totalorder %s69, %s70
      %p82 = scmp.eq.s32.totalorder %s18, 1
      %p83 = por %p81, %p82
      %p85 = scmp.ne.s32.totalorder %s70, %s84
      %p86 = scmp.eq.s32.totalorder %s18, 0
      %p87 = por %p85, %p86
      %s88 = ssub.s32 %s12, %s19
      %p89 = scmp.eq.s32.totalorder %s88, 0
      %s91 = sadd.s32 %s90, 1
      %s92 = scalar_select %p89, %s90, %s91
      %p95 = pneg %p89
      %p96 = scmp.eq.s32.totalorder %s12, 1
      %p97 = por %p95, %p96
      %p98 = scmp.ne.s32.totalorder %s90, %s93
      %p99 = scmp.eq.s32.totalorder %s12, 0
      %p100 = por %p98, %p99
      %p101 = scmp.ne.s32.totalorder %s90, %s93
      %p102 = scmp.eq.s32.totalorder %s17, 1
      %p103 = por %p101, %p102
      %p104 = scmp.ne.s32.totalorder %s93, %s94
      %p105 = scmp.eq.s32.totalorder %s17, 0
      %p106 = por %p104, %p105
      %p107 = scmp.ne.s32.totalorder %s93, %s94
      %p108 = scmp.eq.s32.totalorder %s18, 1
      %p109 = por %p107, %p108
      %p111 = scmp.ne.s32.totalorder %s94, %s110
      %p112 = scmp.eq.s32.totalorder %s18, 0
      %p113 = por %p111, %p112
      %p114 = scmp.le.s32.totalorder 1, %s12
      %p115 = scmp.lt.s32.totalorder %s12, 3
      %p116 = pnand %p114, %p115
      %p117 = pneg %p116
      // Predicated region
      $region9: #{tpu_custom_call.1} parent=5 // pred_check
        _
      $region10: #{tpu_custom_call.1} parent=5 // pred_check_branch
        %119 = sbr.rel (%p116) target = $region12
      $region11: #{tpu_custom_call.1} parent=5 // pred_region
        %s120 = ssub.s32 %s12, 1
        // Predicated region
        $region13: #{tpu_custom_call.1} parent=11 // pred_check
          %p121 = pneg %p59
        $region14: #{tpu_custom_call.1} parent=11 // pred_check_branch
          %123 = sbr.rel (%p121) target = $region16
        $region15: #{tpu_custom_call.1} parent=11 // pred_region
          _
        $region16: #{tpu_custom_call.1} parent=11 // pred_fallthru
          _
        // Predicated region
        $region17: #{tpu_custom_call.1} parent=11 // pred_check
          %p124 = pneg %p80
        $region18: #{tpu_custom_call.1} parent=11 // pred_check_branch
          %126 = sbr.rel (%p124) target = $region20
        $region19: #{tpu_custom_call.1} parent=11 // pred_region
          _
        $region20: #{tpu_custom_call.1} parent=11 // pred_fallthru
          _
      $region12: #{tpu_custom_call.1} parent=5 // pred_fallthru
        _
      %p127 = scmp.lt.s32.totalorder %s12, 2
      // Predicated region
      $region21: #{tpu_custom_call.1} parent=5 // pred_check
        %p128 = pneg %p127
      $region22: #{tpu_custom_call.1} parent=5 // pred_check_branch
        %130 = sbr.rel (%p128) target = $region24
      $region23: #{tpu_custom_call.1} parent=5 // pred_region
        // Predicated region
        $region25: #{tpu_custom_call.1} parent=23 // pred_check
          %p131 = pneg %p32
        $region26: #{tpu_custom_call.1} parent=23 // pred_check_branch
          %133 = sbr.rel (%p131) target = $region28
        $region27: #{tpu_custom_call.1} parent=23 // pred_region
          %p134 = scmp.lt.s32.totalorder %s12, 1
          %s135 = scalar_select %p134, %s12, 1
          %s136 = smul.addr %s135, 3
          %s137 = smul.addr %s136, 8
          %s138 = scalar_lea.vmem %s0, %s137
        $region28: #{tpu_custom_call.1} parent=23 // pred_fallthru
          _
      $region24: #{tpu_custom_call.1} parent=5 // pred_fallthru
        _
      %p139 = scmp.le.s32.totalorder 1, %s12
      %p140 = scmp.lt.s32.totalorder %s12, 3
      %p141 = pnand %p139, %p140
      %p142 = pneg %p141
      // Predicated region
      $region29: #{tpu_custom_call.1} parent=5 // pred_check
        _
      $region30: #{tpu_custom_call.1} parent=5 // pred_check_branch
        %144 = sbr.rel (%p141) target = $region32
      $region31: #{tpu_custom_call.1} parent=5 // pred_region
        %s145 = ssub.s32 %s12, 1
        %p146 = scmp.lt.s32.totalorder %s17, 1
        %s147 = scalar_select %p146, %s17, 1
        %s148 = smul.addr %s147, 3
        %s149 = smul.addr %s148, 8
        %s150 = scalar_lea.vmem %s0, %s149
        %p151 = pneg %p38
        %p152 = pneg %p35
        %p153 = pneg %p59
        %p154 = pneg %p56
        %p155 = pneg %p80
        %p156 = pneg %p77
        %p157 = pneg %p106
        %p158 = pneg %p103
        %s159 = sand.u32 %s93, 1
        %s160 = scalar_lea.sflag [#allocation3], %s159
        %s161 = sand.u32 %s93, 1
        %s162 = smul.addr %s161, 16
        %s163 = scalar_lea.vmem [#allocation2], %s162
        %p164 = scmp.lt.s32.totalorder %s17, 1
        %s165 = scalar_select %p164, %s17, 1
        %s166 = smul.addr %s165, 3
        %s167 = smul.addr %s166, 8
        %s168 = scalar_lea.vmem %s0, %s167
        %v169 = vld [vmem:[%s168] sm:$0xff]
        %v170 = vld [vmem:[%s168 + $0x8] sm:$0xff]
        %v171 = vld [vmem:[%s168 + $0x10] sm:$0x3]
        %v172 = vld [vmem:[%s1] sm:$0xff]
        %v173 = vld [vmem:[%s1 + $0x8] sm:$0xff]
        %v174 = vld [vmem:[%s1 + $0x10] sm:$0xff]
        %v175 = vld [vmem:[%s1 + $0x18] sm:$0xff]
        %v176 = vld [vmem:[%s1 + $0x20] sm:$0xff]
        %v177 = vld [vmem:[%s1 + $0x28] sm:$0xff]
        %v178 = vld [vmem:[%s1 + $0x30] sm:$0xff]
        %v179 = vld [vmem:[%s1 + $0x38] sm:$0xff]
        %v180 = vld [vmem:[%s1 + $0x40] sm:$0xff]
        %v181 = vld [vmem:[%s1 + $0x48] sm:$0xff]
        %v182 = vld [vmem:[%s1 + $0x50] sm:$0xff]
        %v183 = vld [vmem:[%s1 + $0x58] sm:$0xff]
        %v184 = vld [vmem:[%s1 + $0x60] sm:$0xff]
        %v185 = vld [vmem:[%s1 + $0x68] sm:$0xff]
        %v186 = vld [vmem:[%s1 + $0x70] sm:$0xff]
        %v187 = vld [vmem:[%s1 + $0x78] sm:$0xff]
        %v188 = vld [vmem:[%s1 + $0x80] sm:$0xff]
        %v189 = vld [vmem:[%s1 + $0x88] sm:$0xff]
        %v190 = vld [vmem:[%s1 + $0x90] sm:$0xff]
        %v191 = vld [vmem:[%s1 + $0x98] sm:$0xff]
        %v192 = vld [vmem:[%s1 + $0xa0] sm:$0xff]
        %v193 = vld [vmem:[%s1 + $0xa8] sm:$0xff]
        %v194 = vld [vmem:[%s1 + $0xb0] sm:$0xff]
        %v195 = vld [vmem:[%s1 + $0xb8] sm:$0xff]
        %v196 = vld [vmem:[%s1 + $0xc0] sm:$0xff]
        %v197 = vld [vmem:[%s1 + $0xc8] sm:$0xff]
        %v198 = vld [vmem:[%s1 + $0xd0] sm:$0xff]
        %v199 = vld [vmem:[%s1 + $0xd8] sm:$0xff]
        %v200 = vld [vmem:[%s1 + $0xe0] sm:$0xff]
        %v201 = vld [vmem:[%s1 + $0xe8] sm:$0xff]
        %v202 = vld [vmem:[%s1 + $0xf0] sm:$0xff]
        %v203 = vld [vmem:[%s1 + $0xf8] sm:$0xff]
        %vm207 = vcmask 1046528
        %v208 = vrot.slane %v169, 1
        %v209 = vrot.slane %v170, 1
        %v210 = vsel %vm207, %v208, %v209
        %v211 = vrot.slane %v171, 1
        %v212 = vsel %vm207, %v209, %v211
        %vm213 = vcmask 523264
        %v214 = vsel %vm213, %v210, 0
        %v216 = vsel %vm213, %v212, 0
        %v218 = vsel %vm213, %v211, 0
        %220 = vmatprep.subr.mxu0 %v189
        %221 = vmatpush1.msra.mxu0 %v188
        %222 = vmatprep.subr.mxu0 %v191
        %223 = vmatpush1.msra.mxu0 %v190
        %224 = vmatprep.subr.mxu0 %v193
        %225 = vmatpush1.msra.mxu0 %v192
        %226 = vmatprep.subr.mxu0 %v195
        %227 = vmatpush1.msra.mxu0 %v194
        %228 = vmatprep.subr.mxu0 %v197
        %229 = vmatpush1.msra.mxu0 %v196
        %230 = vmatprep.subr.mxu0 %v199
        %231 = vmatpush1.msra.mxu0 %v198
        %232 = vmatprep.subr.mxu0 %v201
        %233 = vmatpush1.msra.mxu0 %v200
        %234 = vmatprep.subr.mxu0 %v203
        %235 = vmatpush1.msra.mxu0 %v202
        %236 = vmatprep.subr.mxu0 0.0
        %237 = vmatpush1.msra.mxu0 0.0
        %238 = vmatprep.subr.mxu0 0.0
        %239 = vmatpush1.msra.mxu0 0.0
        %240 = vmatprep.subr.mxu0 0.0
        %241 = vmatpush1.msra.mxu0 0.0
        %242 = vmatprep.subr.mxu0 0.0
        %243 = vmatpush1.msra.mxu0 0.0
        %244 = vmatprep.subr.mxu0 0.0
        %245 = vmatpush1.msra.mxu0 0.0
        %246 = vmatprep.subr.mxu0 0.0
        %247 = vmatpush1.msra.mxu0 0.0
        %248 = vmatprep.subr.mxu0 0.0
        %249 = vmatpush1.msra.mxu0 0.0
        %250 = vmatprep.subr.mxu0 0.0
        %251 = vmatpush1.msra.mxu0 0.0
        %252 = vmatprep.subr.mxu0 0.0
        %253 = vmatpush1.msra.mxu0 0.0
        %254 = vmatprep.subr.mxu0 0.0
        %255 = vmatpush1.msra.mxu0 0.0
        %256 = vmatprep.subr.mxu0 0.0
        %257 = vmatpush1.msra.mxu0 0.0
        %258 = vmatprep.subr.mxu0 0.0
        %259 = vmatpush1.msra.mxu0 0.0
        %260 = vmatprep.subr.mxu0 0.0
        %261 = vmatpush1.msra.mxu0 0.0
        %262 = vmatprep.subr.mxu0 0.0
        %263 = vmatpush1.msra.mxu0 0.0
        %264 = vmatprep.subr.mxu0 0.0
        %265 = vmatpush1.msra.mxu0 0.0
        %266 = vmatprep.subr.mxu0 0.0
        %267 = vmatpush1.msra.mxu0 0.0
        %268 = vmatprep.subr.mxu0 0.0
        %269 = vmatpush1.msra.mxu0 0.0
        %270 = vmatprep.subr.mxu0 0.0
        %271 = vmatpush1.msra.mxu0 0.0
        %272 = vmatprep.subr.mxu0 0.0
        %273 = vmatpush1.msra.mxu0 0.0
        %274 = vmatprep.subr.mxu0 0.0
        %275 = vmatpush1.msra.mxu0 0.0
        %276 = vmatprep.subr.mxu0 0.0
        %277 = vmatpush1.msra.mxu0 0.0
        %278 = vmatprep.subr.mxu0 0.0
        %279 = vmatpush1.msra.mxu0 0.0
        %280 = vmatprep.subr.mxu0 0.0
        %281 = vmatpush1.msra.mxu0 0.0
        %282 = vmatprep.subr.mxu0 0.0
        %283 = vmatpush1.msra.mxu0 0.0
        %284 = vmatprep.mubr.f32.mxu0 0.0
        %285 = vmatmul.mubr.f32.gmra.mrb[0].mxu0 %v214
        %v286 = vpop.f32.mrb[0].mxu0
        %v287 = vadd.f32 0.0, %v286
        %v288 = vpop.f32.mrb[0].mxu0
        %v289 = vadd.f32 0.0, %v288
        %290 = vmatprep.mubr.f32.mxu0 0.0
        %291 = vmatmul.mubr.f32.gmra.mrb[0].mxu0 %v216
        %v292 = vpop.f32.mrb[0].mxu0
        %v293 = vadd.f32 0.0, %v292
        %v294 = vpop.f32.mrb[0].mxu0
        %v295 = vadd.f32 0.0, %v294
        %296 = vmatprep.mubr.f32.mxu0 0.0
        %297 = vmatmul.mubr.f32.gmra.mrb[0].mxu0 %v218
        %v298 = vpop.f32.mrb[0].mxu0
        %v299 = vadd.f32 0.0, %v298
        %v300 = vpop.f32.mrb[0].mxu0
        %v301 = vadd.f32 0.0, %v300
        %302 = vdwg.mxu0
        %v303 = vsel %vm213, %v169, 0
        %v305 = vsel %vm213, %v170, 0
        %v307 = vsel %vm213, %v171, 0
        %309 = vmatprep.subr.mxu0 %v173
        %310 = vmatpush1.msra.mxu0 %v172
        %311 = vmatprep.subr.mxu0 %v175
        %312 = vmatpush1.msra.mxu0 %v174
        %313 = vmatprep.subr.mxu0 %v177
        %314 = vmatpush1.msra.mxu0 %v176
        %315 = vmatprep.subr.mxu0 %v179
        %316 = vmatpush1.msra.mxu0 %v178
        %317 = vmatprep.subr.mxu0 %v181
        %318 = vmatpush1.msra.mxu0 %v180
        %319 = vmatprep.subr.mxu0 %v183
        %320 = vmatpush1.msra.mxu0 %v182
        %321 = vmatprep.subr.mxu0 %v185
        %322 = vmatpush1.msra.mxu0 %v184
        %323 = vmatprep.subr.mxu0 %v187
        %324 = vmatpush1.msra.mxu0 %v186
        %325 = vmatprep.subr.mxu0 0.0
        %326 = vmatpush1.msra.mxu0 0.0
        %327 = vmatprep.subr.mxu0 0.0
        %328 = vmatpush1.msra.mxu0 0.0
        %329 = vmatprep.subr.mxu0 0.0
        %330 = vmatpush1.msra.mxu0 0.0
        %331 = vmatprep.subr.mxu0 0.0
        %332 = vmatpush1.msra.mxu0 0.0
        %333 = vmatprep.subr.mxu0 0.0
        %334 = vmatpush1.msra.mxu0 0.0
        %335 = vmatprep.subr.mxu0 0.0
        %336 = vmatpush1.msra.mxu0 0.0
        %337 = vmatprep.subr.mxu0 0.0
        %338 = vmatpush1.msra.mxu0 0.0
        %339 = vmatprep.subr.mxu0 0.0
        %340 = vmatpush1.msra.mxu0 0.0
        %341 = vmatprep.subr.mxu0 0.0
        %342 = vmatpush1.msra.mxu0 0.0
        %343 = vmatprep.subr.mxu0 0.0
        %344 = vmatpush1.msra.mxu0 0.0
        %345 = vmatprep.subr.mxu0 0.0
        %346 = vmatpush1.msra.mxu0 0.0
        %347 = vmatprep.subr.mxu0 0.0
        %348 = vmatpush1.msra.mxu0 0.0
        %349 = vmatprep.subr.mxu0 0.0
        %350 = vmatpush1.msra.mxu0 0.0
        %351 = vmatprep.subr.mxu0 0.0
        %352 = vmatpush1.msra.mxu0 0.0
        %353 = vmatprep.subr.mxu0 0.0
        %354 = vmatpush1.msra.mxu0 0.0
        %355 = vmatprep.subr.mxu0 0.0
        %356 = vmatpush1.msra.mxu0 0.0
        %357 = vmatprep.subr.mxu0 0.0
        %358 = vmatpush1.msra.mxu0 0.0
        %359 = vmatprep.subr.mxu0 0.0
        %360 = vmatpush1.msra.mxu0 0.0
        %361 = vmatprep.subr.mxu0 0.0
        %362 = vmatpush1.msra.mxu0 0.0
        %363 = vmatprep.subr.mxu0 0.0
        %364 = vmatpush1.msra.mxu0 0.0
        %365 = vmatprep.subr.mxu0 0.0
        %366 = vmatpush1.msra.mxu0 0.0
        %367 = vmatprep.subr.mxu0 0.0
        %368 = vmatpush1.msra.mxu0 0.0
        %369 = vmatprep.subr.mxu0 0.0
        %370 = vmatpush1.msra.mxu0 0.0
        %371 = vmatprep.subr.mxu0 0.0
        %372 = vmatpush1.msra.mxu0 0.0
        %373 = vmatprep.mubr.f32.mxu0 0.0
        %374 = vmatmul.mubr.f32.gmra.mrb[0].mxu0 %v303
        %v375 = vpop.f32.mrb[0].mxu0
        %v376 = vadd.f32 %v287, %v375
        %v377 = vpop.f32.mrb[0].mxu0
        %v378 = vadd.f32 %v289, %v377
        %379 = vmatprep.mubr.f32.mxu0 0.0
        %380 = vmatmul.mubr.f32.gmra.mrb[0].mxu0 %v305
        %v381 = vpop.f32.mrb[0].mxu0
        %v382 = vadd.f32 %v293, %v381
        %v383 = vpop.f32.mrb[0].mxu0
        %v384 = vadd.f32 %v295, %v383
        %385 = vmatprep.mubr.f32.mxu0 0.0
        %386 = vmatmul.mubr.f32.gmra.mrb[0].mxu0 %v307
        %v387 = vpop.f32.mrb[0].mxu0
        %v388 = vadd.f32 %v299, %v387
        %v389 = vpop.f32.mrb[0].mxu0
        %v390 = vadd.f32 %v301, %v389
        %391 = vdwg.mxu0
        %v392 = vmul.f32 %v376, %v376
        %v393 = vmul.f32 %v378, %v378
        %v394 = vmul.f32 %v382, %v382
        %v395 = vmul.f32 %v384, %v384
        %v396 = vmul.f32 %v388, %v388
        %v397 = vmul.f32 %v390, %v390
        %v398 = vld [vmem:[%s2] sm:$0xff]
        %v399 = vld [vmem:[%s2 + $0x8] sm:$0xff]
        %v400 = vld [vmem:[%s2 + $0x10] sm:$0xff]
        %v401 = vld [vmem:[%s2 + $0x18] sm:$0xff]
        %vm402 = vcmask 15360
        %v404 = vsel %vm402, %v399, 0
        %v407 = vsel %vm402, %v401, 0
        %v410 = vsel %vm402, %v393, 0
        %v413 = vsel %vm402, %v395, 0
        %v416 = vsel %vm402, %v397, 0
        %418 = vmatprep.subr.mxu0 %v410
        %419 = vmatpush1.xpose.msra.mxu0 %v392
        %420 = vmatprep.subr.mxu0 %v413
        %421 = vmatpush1.xpose.msra.mxu0 %v394
        %422 = vmatprep.subr.mxu0 %v416
        %423 = vmatpush1.xpose.msra.mxu0 %v396
        %424 = vmatprep.subr.mxu0 0.0
        %425 = vmatpush1.xpose.msra.mxu0 0.0
        %426 = vmatprep.subr.mxu0 0.0
        %427 = vmatpush1.xpose.msra.mxu0 0.0
        %428 = vmatprep.subr.mxu0 0.0
        %429 = vmatpush1.xpose.msra.mxu0 0.0
        %430 = vmatprep.subr.mxu0 0.0
        %431 = vmatpush1.xpose.msra.mxu0 0.0
        %432 = vmatprep.subr.mxu0 0.0
        %433 = vmatpush1.xpose.msra.mxu0 0.0
        %434 = vmatprep.subr.mxu0 0.0
        %435 = vmatpush1.xpose.msra.mxu0 0.0
        %436 = vmatprep.subr.mxu0 0.0
        %437 = vmatpush1.xpose.msra.mxu0 0.0
        %438 = vmatprep.subr.mxu0 0.0
        %439 = vmatpush1.xpose.msra.mxu0 0.0
        %440 = vmatprep.subr.mxu0 0.0
        %441 = vmatpush1.xpose.msra.mxu0 0.0
        %442 = vmatprep.subr.mxu0 0.0
        %443 = vmatpush1.xpose.msra.mxu0 0.0
        %444 = vmatprep.subr.mxu0 0.0
        %445 = vmatpush1.xpose.msra.mxu0 0.0
        %446 = vmatprep.subr.mxu0 0.0
        %447 = vmatpush1.xpose.msra.mxu0 0.0
        %448 = vmatprep.subr.mxu0 0.0
        %449 = vmatpush1.xpose.msra.mxu0 0.0
        %450 = vmatprep.subr.mxu0 0.0
        %451 = vmatpush1.xpose.msra.mxu0 0.0
        %452 = vmatprep.subr.mxu0 0.0
        %453 = vmatpush1.xpose.msra.mxu0 0.0
        %454 = vmatprep.subr.mxu0 0.0
        %455 = vmatpush1.xpose.msra.mxu0 0.0
        %456 = vmatprep.subr.mxu0 0.0
        %457 = vmatpush1.xpose.msra.mxu0 0.0
        %458 = vmatprep.subr.mxu0 0.0
        %459 = vmatpush1.xpose.msra.mxu0 0.0
        %460 = vmatprep.subr.mxu0 0.0
        %461 = vmatpush1.xpose.msra.mxu0 0.0
        %462 = vmatprep.subr.mxu0 0.0
        %463 = vmatpush1.xpose.msra.mxu0 0.0
        %464 = vmatprep.subr.mxu0 0.0
        %465 = vmatpush1.xpose.msra.mxu0 0.0
        %466 = vmatprep.subr.mxu0 0.0
        %467 = vmatpush1.xpose.msra.mxu0 0.0
        %468 = vmatprep.subr.mxu0 0.0
        %469 = vmatpush1.xpose.msra.mxu0 0.0
        %470 = vmatprep.subr.mxu0 0.0
        %471 = vmatpush1.xpose.msra.mxu0 0.0
        %472 = vmatprep.subr.mxu0 0.0
        %473 = vmatpush1.xpose.msra.mxu0 0.0
        %474 = vmatprep.subr.mxu0 0.0
        %475 = vmatpush1.xpose.msra.mxu0 0.0
        %476 = vmatprep.subr.mxu0 0.0
        %477 = vmatpush1.xpose.msra.mxu0 0.0
        %478 = vmatprep.subr.mxu0 0.0
        %479 = vmatpush1.xpose.msra.mxu0 0.0
        %480 = vmatprep.subr.mxu0 0.0
        %481 = vmatpush1.xpose.msra.mxu0 0.0
        %482 = vmatprep.mubr.f32.mxu0 %v404
        %483 = vmatmul.mubr.f32.gmra.mrb[0].mxu0 %v398
        %v484 = vpop.f32.mrb[0].mxu0
        %v485 = vadd.f32 1.1920929e-07, %v484
        %v486 = vpop.f32.mrb[0].mxu0
        %487 = vmatprep.mubr.f32.mxu0 %v407
        %488 = vmatmul.mubr.f32.gmra.mrb[0].mxu0 %v400
        %v489 = vpop.f32.mrb[0].mxu0
        %v490 = vadd.f32 1.1920929e-07, %v489
        %v491 = vpop.f32.mrb[0].mxu0
        %492 = vdwg.mxu0
        %v493 = vlog2.pop %v485
        %v494 = vmul.f32 %v493, 0.6931472
        %v495 = vlog2.pop %v490
        %v496 = vmul.f32 %v495, 0.6931472
        %v497 = vsub.f32 %v494, -4.5
        %v498 = vsub.f32 %v496, -4.5
        %v499 = vrcp.pop 5.0
        %v500 = vmul.f32 %v497, %v499
        %v501 = vmul.f32 %v498, %v499
        %vm502 = vcmask 138240
        %503 = vst.msk [vmem:[%s163] sm:$0xff] %vm502, %v500
        %504 = vst.msk [vmem:[%s163 + $0x8] sm:$0xff] %vm502, %v501
        %s505 = sand.u32 %s93, 1
        %s506 = scalar_lea.sflag [#allocation3], %s505
        %s507 = sand.u32 %s93, 1
        %s508 = smul.addr %s507, 16
        %s509 = scalar_lea.vmem [#allocation2], %s508
        // Predicated region
        $region33: #{tpu_custom_call.1} parent=31 // pred_check
          %p510 = pneg %p103
        $region34: #{tpu_custom_call.1} parent=31 // pred_check_branch
          %512 = sbr.rel (%p510) target = $region36
        $region35: #{tpu_custom_call.1} parent=31 // pred_region
          %s514 = ssub.s32 256, 256
          %515 = vsyncadd %s506, %s514
          %s516 = smul.addr %s17, 2
          %s517 = smul.addr %s516, 128
          %s518 = scalar_lea.hbm %s3, %s517
          %s519 = sshll.u32 %s509, 4
          %s520 = int_to_ptr.vmem [resolvable:$true] %s519
          %525 = dma.vmem_to_hbm [thread:$0]  %s520, 256, %s518, %s506, 128, 128, 8
        $region36: #{tpu_custom_call.1} parent=31 // pred_fallthru
          _
      $region32: #{tpu_custom_call.1} parent=5 // pred_fallthru
        _
      %p526 = scmp.le.s32.totalorder 2, %s12
      // Predicated region
      $region37: #{tpu_custom_call.1} parent=5 // pred_check
        %p527 = pneg %p526
      $region38: #{tpu_custom_call.1} parent=5 // pred_check_branch
        %529 = sbr.rel (%p527) target = $region40
      $region39: #{tpu_custom_call.1} parent=5 // pred_region
        %s530 = ssub.s32 %s12, 2
        // Predicated region
        $region41: #{tpu_custom_call.1} parent=39 // pred_check
          %p531 = pneg %p109
        $region42: #{tpu_custom_call.1} parent=39 // pred_check_branch
          %533 = sbr.rel (%p531) target = $region44
        $region43: #{tpu_custom_call.1} parent=39 // pred_region
          %s534 = sand.u32 %s94, 1
          %s535 = scalar_lea.sflag [#allocation3], %s534
          %s536 = sand.u32 %s94, 1
          %s537 = smul.addr %s536, 16
          %s538 = scalar_lea.vmem [#allocation2], %s537
          %539 = dma.done %s535, 256
        $region44: #{tpu_custom_call.1} parent=39 // pred_fallthru
          _
      $region40: #{tpu_custom_call.1} parent=5 // pred_fallthru
        _
    $region6: #{tpu_custom_call.1} parent=1 // loop_footer
      %s16 = sadd.s32 1, %s12
    $region7: #{tpu_custom_call.1} parent=1 // loop_footer_branch
      %11 = sbr.rel target = $region3
    $region8: #{tpu_custom_call.1} parent=1 // loop_exit
      _
    %540 = vsyncpa [#allocation3], 1
    %s541 = scalar_lea.sflag [#allocation3], 1
    %542 = vsyncpa %s541, 1

</llo_original>
